<compile_context>
chip_gen: v6e
topology: v6e:2x2x1
jax: 0.10.0
libtpu: 0.0.40
codegen_flags: <defaults>
</compile_context>

<pallas_src>
import jax
import jax.numpy as jnp
import numpy as np
from jax.experimental import pallas as pl
from jax.experimental.pallas import tpu as pltpu


def basic_block_kernel(x_ref, m1_ref, s1_ref, b1_ref, m2_ref, s2_ref, b2_ref,
                       out_ref, pad_ref):
    # x_ref  : (1, H, W*C)    f32 lane-folded input (also the identity branch)
    # m1_ref : (3, W*C, W*C)  bf16 block-banded conv1 weights, one matrix per kh
    # s1/b1  : (1, W*C)       f32 folded BN1 scale / bias, tiled over W
    # m2/s2/b2: same for conv2 / BN2
    # out_ref: (1, H, W*C)    f32
    # pad_ref: (H+2, W*C)     f32 VMEM scratch, H-padded work buffer
    H = out_ref.shape[1]
    WC = out_ref.shape[2]

    # Zero only the two border rows; interior rows are fully overwritten below,
    # so no cross-iteration state is carried (safe with "parallel" batch axis).
    zrow = jnp.zeros((1, WC), pad_ref.dtype)
    pad_ref[0:1, :] = zrow
    pad_ref[H + 1:H + 2, :] = zrow

    x = x_ref[0]                                      # (H, W*C) f32
    pad_ref[1:H + 1, :] = x

    # ---- conv1: 3 MXU matmuls (bf16 operands, f32 accumulation) ----
    acc = jnp.dot(pad_ref[0:H, :].astype(jnp.bfloat16), m1_ref[0],
                  preferred_element_type=jnp.float32)
    acc = acc + jnp.dot(x.astype(jnp.bfloat16), m1_ref[1],
                        preferred_element_type=jnp.float32)
    acc = acc + jnp.dot(pad_ref[2:H + 2, :].astype(jnp.bfloat16), m1_ref[2],
                        preferred_element_type=jnp.float32)

    # ---- bn1 (folded affine) + relu in f32; reuse the scratch for conv2 ----
    h1 = jnp.maximum(acc * s1_ref[0] + b1_ref[0], 0.0)
    pad_ref[1:H + 1, :] = h1

    # ---- conv2 ----
    acc2 = jnp.dot(pad_ref[0:H, :].astype(jnp.bfloat16), m2_ref[0],
                   preferred_element_type=jnp.float32)
    acc2 = acc2 + jnp.dot(h1.astype(jnp.bfloat16), m2_ref[1],
                          preferred_element_type=jnp.float32)
    acc2 = acc2 + jnp.dot(pad_ref[2:H + 2, :].astype(jnp.bfloat16), m2_ref[2],
                          preferred_element_type=jnp.float32)

    # ---- bn2 + residual add + relu (all f32) ----
    y = acc2 * s2_ref[0] + b2_ref[0] + x
    out_ref[0] = jnp.maximum(y, 0.0).astype(out_ref.dtype)


def make_banded_weights(w_hwio, W):
    """(3,3,Cin,Cout) SAME-conv weights -> (3, W*Cin, W*Cout) banded matrices.

    out_row[h] = sum_kh in_row_padded[h+kh] @ M[kh]; the kw shift and the
    W-direction zero padding are folded into the band structure.
    """
    w = np.asarray(w_hwio, np.float32)
    KH, KW, Cin, Cout = w.shape
    M = np.zeros((KH, W * Cin, W * Cout), np.float32)
    for kh in range(KH):
        for kw in range(KW):
            for wo in range(W):
                wi = wo + kw - (KW // 2)
                if 0 <= wi < W:
                    M[kh, wi * Cin:(wi + 1) * Cin,
                      wo * Cout:(wo + 1) * Cout] = w[kh, kw]
    return M


@jax.jit
def basic_block(x_nhwc, m1, s1f, b1f, m2, s2f, b2f):
    N, H, W, C = x_nhwc.shape
    WC = W * C
    assert WC % 128 == 0, "fold W*C onto the lane axis (multiple of 128)"
    x_fold = x_nhwc.reshape(N, H, WC).astype(jnp.float32)

    grid_spec = pltpu.PrefetchScalarGridSpec(
        num_scalar_prefetch=0,
        grid=(N,),
        in_specs=[
            pl.BlockSpec((1, H, WC), lambda n: (n, 0, 0)),     # x (lane-dense)
            pl.BlockSpec((3, WC, WC), lambda n: (0, 0, 0)),    # conv1 banded W
            pl.BlockSpec((1, WC), lambda n: (0, 0)),           # bn1 scale
            pl.BlockSpec((1, WC), lambda n: (0, 0)),           # bn1 bias
            pl.BlockSpec((3, WC, WC), lambda n: (0, 0, 0)),    # conv2 banded W
            pl.BlockSpec((1, WC), lambda n: (0, 0)),           # bn2 scale
            pl.BlockSpec((1, WC), lambda n: (0, 0)),           # bn2 bias
        ],
        out_specs=pl.BlockSpec((1, H, WC), lambda n: (n, 0, 0)),
        scratch_shapes=[pltpu.VMEM((H + 2, WC), jnp.float32)],
    )

    out = pl.pallas_call(
        basic_block_kernel,
        out_shape=jax.ShapeDtypeStruct((N, H, WC), jnp.float32),
        grid_spec=grid_spec,
        compiler_params=pltpu.CompilerParams(
            dimension_semantics=("parallel",)),
    )(x_fold, m1, s1f, b1f, m2, s2f, b2f)
    return out.reshape(N, H, W, C)


def _fold_bn(gamma, beta, mean, var, eps=1e-5):
    scale = gamma / jnp.sqrt(var + eps)
    bias = beta - mean * scale
    return scale, bias


def pack_block_params(w1_oikk, s1, b1, w2_oikk, s2, b2, W):
    """PyTorch-layout weights + folded BN -> kernel-ready packed params."""
    w1_hwio = jnp.transpose(w1_oikk, (2, 3, 1, 0))       # (3,3,Cin,Cout)
    w2_hwio = jnp.transpose(w2_oikk, (2, 3, 1, 0))
    m1 = jnp.asarray(make_banded_weights(w1_hwio, W), jnp.bfloat16)
    m2 = jnp.asarray(make_banded_weights(w2_hwio, W), jnp.bfloat16)
    s1f = jnp.tile(s1, W).reshape(1, -1).astype(jnp.float32)
    b1f = jnp.tile(b1, W).reshape(1, -1).astype(jnp.float32)
    s2f = jnp.tile(s2, W).reshape(1, -1).astype(jnp.float32)
    b2f = jnp.tile(b2, W).reshape(1, -1).astype(jnp.float32)
    return (m1, s1f, b1f, m2, s2f, b2f), (w1_hwio, w2_hwio)


def _reference(x_nhwc, w1_hwio, s1, b1, w2_hwio, s2, b2):
    """Pure-JAX f32 reference for correctness checking."""
    dn = jax.lax.conv_dimension_numbers(x_nhwc.shape, w1_hwio.shape,
                                        ("NHWC", "HWIO", "NHWC"))
    y = jax.lax.conv_general_dilated(x_nhwc, w1_hwio, (1, 1), "SAME",
                                     dimension_numbers=dn)
    y = jnp.maximum(y * s1 + b1, 0.0)
    y = jax.lax.conv_general_dilated(y, w2_hwio, (1, 1), "SAME",
                                     dimension_numbers=dn)
    y = y * s2 + b2
    return jnp.maximum(y + x_nhwc, 0.0)


if __name__ == "__main__":
    # Small shapes consistent with BasicBlock(in_channel=8, out_channel=8);
    # W * C = 128 so the folded layout is exactly lane-dense.
    N, C, H, W = 4, 8, 16, 16

    key = jax.random.PRNGKey(0)
    keys = jax.random.split(key, 11)

    # Input, built NCHW (PyTorch convention) then moved to NHWC for the kernel.
    x_nchw = jax.random.normal(keys[0], (N, C, H, W), jnp.float32)
    x_nhwc = jnp.transpose(x_nchw, (0, 2, 3, 1))

    # Conv weights in PyTorch layout (Cout, Cin, kh, kw).
    w1_oikk = jax.random.normal(keys[1], (C, C, 3, 3), jnp.float32) * 0.1
    w2_oikk = jax.random.normal(keys[2], (C, C, 3, 3), jnp.float32) * 0.1

    # BatchNorm (inference mode) parameters.
    g1 = 1.0 + 0.1 * jax.random.normal(keys[3], (C,), jnp.float32)
    be1 = 0.1 * jax.random.normal(keys[4], (C,), jnp.float32)
    mu1 = 0.1 * jax.random.normal(keys[5], (C,), jnp.float32)
    v1 = jnp.abs(1.0 + 0.1 * jax.random.normal(keys[6], (C,), jnp.float32))
    g2 = 1.0 + 0.1 * jax.random.normal(keys[7], (C,), jnp.float32)
    be2 = 0.1 * jax.random.normal(keys[8], (C,), jnp.float32)
    mu2 = 0.1 * jax.random.normal(keys[9], (C,), jnp.float32)
    v2 = jnp.abs(1.0 + 0.1 * jax.random.normal(keys[10], (C,), jnp.float32))

    s1, b1 = _fold_bn(g1, be1, mu1, v1)
    s2, b2 = _fold_bn(g2, be2, mu2, v2)

    packed, (w1_hwio, w2_hwio) = pack_block_params(w1_oikk, s1, b1,
                                                   w2_oikk, s2, b2, W)

    out = basic_block(x_nhwc, *packed)
    out = jax.block_until_ready(out)

    ref = _reference(x_nhwc, w1_hwio, s1, b1, w2_hwio, s2, b2)
    ref = jax.block_until_ready(ref)

    # bf16 MXU operands (f32 accumulation) -> slightly looser tolerance.
    np.testing.assert_allclose(np.asarray(out), np.asarray(ref),
                               rtol=3e-2, atol=3e-2)
    print("KERNEL_OK")
</pallas_src>

<mosaic_0001>
module attributes {stable_mosaic.version = 11 : i64} {
  func.func @basic_block_kernel(%arg0: i32, %arg1: memref<1x16x128xf32, #tpu.memory_space<vmem>>, %arg2: memref<3x128x128xbf16, #tpu.memory_space<vmem>>, %arg3: memref<1x128xf32, #tpu.memory_space<vmem>>, %arg4: memref<1x128xf32, #tpu.memory_space<vmem>>, %arg5: memref<3x128x128xbf16, #tpu.memory_space<vmem>>, %arg6: memref<1x128xf32, #tpu.memory_space<vmem>>, %arg7: memref<1x128xf32, #tpu.memory_space<vmem>>, %arg8: memref<1x16x128xf32, #tpu.memory_space<vmem>>, %arg9: memref<18x128xf32, #tpu.memory_space<vmem>>) attributes {dimension_semantics = [#tpu.dimension_semantics<parallel>], iteration_bounds = array<i64: 4>, scalar_prefetch = 0 : i64, scratch_operands = 1 : i64, tpu.core_type = #tpu.core_type<tc>, window_params = [{transform_indices = @transform_0, window_bounds = array<i64: 1, 16, 128>}, {pipeline_mode = #tpu.pipeline_mode<synchronous>, transform_indices = @transform_1, window_bounds = array<i64: 3, 128, 128>}, {pipeline_mode = #tpu.pipeline_mode<synchronous>, transform_indices = @transform_2, window_bounds = array<i64: 1, 128>}, {pipeline_mode = #tpu.pipeline_mode<synchronous>, transform_indices = @transform_3, window_bounds = array<i64: 1, 128>}, {pipeline_mode = #tpu.pipeline_mode<synchronous>, transform_indices = @transform_4, window_bounds = array<i64: 3, 128, 128>}, {pipeline_mode = #tpu.pipeline_mode<synchronous>, transform_indices = @transform_5, window_bounds = array<i64: 1, 128>}, {pipeline_mode = #tpu.pipeline_mode<synchronous>, transform_indices = @transform_6, window_bounds = array<i64: 1, 128>}, {transform_indices = @transform_7, window_bounds = array<i64: 1, 16, 128>}]} {
    %cst = arith.constant 0.000000e+00 : f32
    %0 = vector.broadcast %cst : f32 to vector<1x128xf32>
    %c0 = arith.constant 0 : index
    %c0_0 = arith.constant 0 : index
    %1 = vector.load %arg9[%c0, %c0_0] : memref<18x128xf32, #tpu.memory_space<vmem>>, vector<1x128xf32>
    tpu.vector_store %arg9[%c0, %c0_0], %0 {strides = array<i32>} : memref<18x128xf32, #tpu.memory_space<vmem>>, vector<1x128xf32>,
    %c17 = arith.constant 17 : index
    %c0_1 = arith.constant 0 : index
    %2 = vector.load %arg9[%c17, %c0_1] : memref<18x128xf32, #tpu.memory_space<vmem>>, vector<1x128xf32>
    tpu.vector_store %arg9[%c17, %c0_1], %0 {strides = array<i32>} : memref<18x128xf32, #tpu.memory_space<vmem>>, vector<1x128xf32>,
    %c0_2 = arith.constant 0 : index
    %c0_3 = arith.constant 0 : index
    %c0_4 = arith.constant 0 : index
    %3 = vector.load %arg1[%c0_2, %c0_3, %c0_4] : memref<1x16x128xf32, #tpu.memory_space<vmem>>, vector<1x16x128xf32>
    %4 = vector.shape_cast %3 : vector<1x16x128xf32> to vector<16x128xf32>
    %c1 = arith.constant 1 : index
    %c0_5 = arith.constant 0 : index
    %5 = vector.load %arg9[%c1, %c0_5] : memref<18x128xf32, #tpu.memory_space<vmem>>, vector<16x128xf32>
    tpu.vector_store %arg9[%c1, %c0_5], %4 {strides = array<i32>} : memref<18x128xf32, #tpu.memory_space<vmem>>, vector<16x128xf32>,
    %c0_6 = arith.constant 0 : index
    %c0_7 = arith.constant 0 : index
    %6 = vector.load %arg9[%c0_6, %c0_7] : memref<18x128xf32, #tpu.memory_space<vmem>>, vector<16x128xf32>
    %7 = arith.truncf %6 : vector<16x128xf32> to vector<16x128xbf16>
    %c0_8 = arith.constant 0 : index
    %c0_9 = arith.constant 0 : index
    %c0_10 = arith.constant 0 : index
    %8 = vector.load %arg2[%c0_8, %c0_9, %c0_10] : memref<3x128x128xbf16, #tpu.memory_space<vmem>>, vector<1x128x128xbf16>
    %9 = vector.shape_cast %8 : vector<1x128x128xbf16> to vector<128x128xbf16>
    %cst_11 = arith.constant dense<0.000000e+00> : vector<16x128xf32>
    %10 = tpu.matmul %7, %9, %cst_11 {dimension_numbers = #tpu.dot_dimension_numbers<[1], [0], [0], [1], [0, 0, 1, 1], [], []>} : vector<16x128xbf16>, vector<128x128xbf16>, vector<16x128xf32> -> vector<16x128xf32>
    %11 = arith.truncf %4 : vector<16x128xf32> to vector<16x128xbf16>
    %c1_12 = arith.constant 1 : index
    %c0_13 = arith.constant 0 : index
    %c0_14 = arith.constant 0 : index
    %12 = vector.load %arg2[%c1_12, %c0_13, %c0_14] : memref<3x128x128xbf16, #tpu.memory_space<vmem>>, vector<1x128x128xbf16>
    %13 = vector.shape_cast %12 : vector<1x128x128xbf16> to vector<128x128xbf16>
    %cst_15 = arith.constant dense<0.000000e+00> : vector<16x128xf32>
    %14 = tpu.matmul %11, %13, %cst_15 {dimension_numbers = #tpu.dot_dimension_numbers<[1], [0], [0], [1], [0, 0, 1, 1], [], []>} : vector<16x128xbf16>, vector<128x128xbf16>, vector<16x128xf32> -> vector<16x128xf32>
    %15 = arith.addf %10, %14 : vector<16x128xf32>
    %c2 = arith.constant 2 : index
    %c0_16 = arith.constant 0 : index
    %16 = vector.load %arg9[%c2, %c0_16] : memref<18x128xf32, #tpu.memory_space<vmem>>, vector<16x128xf32>
    %17 = arith.truncf %16 : vector<16x128xf32> to vector<16x128xbf16>
    %c2_17 = arith.constant 2 : index
    %c0_18 = arith.constant 0 : index
    %c0_19 = arith.constant 0 : index
    %18 = vector.load %arg2[%c2_17, %c0_18, %c0_19] : memref<3x128x128xbf16, #tpu.memory_space<vmem>>, vector<1x128x128xbf16>
    %19 = vector.shape_cast %18 : vector<1x128x128xbf16> to vector<128x128xbf16>
    %cst_20 = arith.constant dense<0.000000e+00> : vector<16x128xf32>
    %20 = tpu.matmul %17, %19, %cst_20 {dimension_numbers = #tpu.dot_dimension_numbers<[1], [0], [0], [1], [0, 0, 1, 1], [], []>} : vector<16x128xbf16>, vector<128x128xbf16>, vector<16x128xf32> -> vector<16x128xf32>
    %21 = arith.addf %15, %20 : vector<16x128xf32>
    %c0_21 = arith.constant 0 : index
    %c0_22 = arith.constant 0 : index
    %22 = vector.load %arg3[%c0_21, %c0_22] : memref<1x128xf32, #tpu.memory_space<vmem>>, vector<1x128xf32>
    %23 = vector.shape_cast %22 : vector<1x128xf32> to vector<128xf32>
    %24 = vector.shape_cast %23 : vector<128xf32> to vector<1x128xf32>
    %25 = vector.broadcast %24 : vector<1x128xf32> to vector<16x128xf32>
    %26 = arith.mulf %21, %25 : vector<16x128xf32>
    %c0_23 = arith.constant 0 : index
    %c0_24 = arith.constant 0 : index
    %27 = vector.load %arg4[%c0_23, %c0_24] : memref<1x128xf32, #tpu.memory_space<vmem>>, vector<1x128xf32>
    %28 = vector.shape_cast %27 : vector<1x128xf32> to vector<128xf32>
    %29 = vector.shape_cast %28 : vector<128xf32> to vector<1x128xf32>
    %30 = vector.broadcast %29 : vector<1x128xf32> to vector<16x128xf32>
    %31 = arith.addf %26, %30 : vector<16x128xf32>
    %cst_25 = arith.constant 0.000000e+00 : f32
    %32 = vector.broadcast %cst_25 : f32 to vector<16x128xf32>
    %33 = arith.maximumf %31, %32 : vector<16x128xf32>
    %c1_26 = arith.constant 1 : index
    %c0_27 = arith.constant 0 : index
    %34 = vector.load %arg9[%c1_26, %c0_27] : memref<18x128xf32, #tpu.memory_space<vmem>>, vector<16x128xf32>
    tpu.vector_store %arg9[%c1_26, %c0_27], %33 {strides = array<i32>} : memref<18x128xf32, #tpu.memory_space<vmem>>, vector<16x128xf32>,
    %c0_28 = arith.constant 0 : index
    %c0_29 = arith.constant 0 : index
    %35 = vector.load %arg9[%c0_28, %c0_29] : memref<18x128xf32, #tpu.memory_space<vmem>>, vector<16x128xf32>
    %36 = arith.truncf %35 : vector<16x128xf32> to vector<16x128xbf16>
    %c0_30 = arith.constant 0 : index
    %c0_31 = arith.constant 0 : index
    %c0_32 = arith.constant 0 : index
    %37 = vector.load %arg5[%c0_30, %c0_31, %c0_32] : memref<3x128x128xbf16, #tpu.memory_space<vmem>>, vector<1x128x128xbf16>
    %38 = vector.shape_cast %37 : vector<1x128x128xbf16> to vector<128x128xbf16>
    %cst_33 = arith.constant dense<0.000000e+00> : vector<16x128xf32>
    %39 = tpu.matmul %36, %38, %cst_33 {dimension_numbers = #tpu.dot_dimension_numbers<[1], [0], [0], [1], [0, 0, 1, 1], [], []>} : vector<16x128xbf16>, vector<128x128xbf16>, vector<16x128xf32> -> vector<16x128xf32>
    %40 = arith.truncf %33 : vector<16x128xf32> to vector<16x128xbf16>
    %c1_34 = arith.constant 1 : index
    %c0_35 = arith.constant 0 : index
    %c0_36 = arith.constant 0 : index
    %41 = vector.load %arg5[%c1_34, %c0_35, %c0_36] : memref<3x128x128xbf16, #tpu.memory_space<vmem>>, vector<1x128x128xbf16>
    %42 = vector.shape_cast %41 : vector<1x128x128xbf16> to vector<128x128xbf16>
    %cst_37 = arith.constant dense<0.000000e+00> : vector<16x128xf32>
    %43 = tpu.matmul %40, %42, %cst_37 {dimension_numbers = #tpu.dot_dimension_numbers<[1], [0], [0], [1], [0, 0, 1, 1], [], []>} : vector<16x128xbf16>, vector<128x128xbf16>, vector<16x128xf32> -> vector<16x128xf32>
    %44 = arith.addf %39, %43 : vector<16x128xf32>
    %c2_38 = arith.constant 2 : index
    %c0_39 = arith.constant 0 : index
    %45 = vector.load %arg9[%c2_38, %c0_39] : memref<18x128xf32, #tpu.memory_space<vmem>>, vector<16x128xf32>
    %46 = arith.truncf %45 : vector<16x128xf32> to vector<16x128xbf16>
    %c2_40 = arith.constant 2 : index
    %c0_41 = arith.constant 0 : index
    %c0_42 = arith.constant 0 : index
    %47 = vector.load %arg5[%c2_40, %c0_41, %c0_42] : memref<3x128x128xbf16, #tpu.memory_space<vmem>>, vector<1x128x128xbf16>
    %48 = vector.shape_cast %47 : vector<1x128x128xbf16> to vector<128x128xbf16>
    %cst_43 = arith.constant dense<0.000000e+00> : vector<16x128xf32>
    %49 = tpu.matmul %46, %48, %cst_43 {dimension_numbers = #tpu.dot_dimension_numbers<[1], [0], [0], [1], [0, 0, 1, 1], [], []>} : vector<16x128xbf16>, vector<128x128xbf16>, vector<16x128xf32> -> vector<16x128xf32>
    %50 = arith.addf %44, %49 : vector<16x128xf32>
    %c0_44 = arith.constant 0 : index
    %c0_45 = arith.constant 0 : index
    %51 = vector.load %arg6[%c0_44, %c0_45] : memref<1x128xf32, #tpu.memory_space<vmem>>, vector<1x128xf32>
    %52 = vector.shape_cast %51 : vector<1x128xf32> to vector<128xf32>
    %53 = vector.shape_cast %52 : vector<128xf32> to vector<1x128xf32>
    %54 = vector.broadcast %53 : vector<1x128xf32> to vector<16x128xf32>
    %55 = arith.mulf %50, %54 : vector<16x128xf32>
    %c0_46 = arith.constant 0 : index
    %c0_47 = arith.constant 0 : index
    %56 = vector.load %arg7[%c0_46, %c0_47] : memref<1x128xf32, #tpu.memory_space<vmem>>, vector<1x128xf32>
    %57 = vector.shape_cast %56 : vector<1x128xf32> to vector<128xf32>
    %58 = vector.shape_cast %57 : vector<128xf32> to vector<1x128xf32>
    %59 = vector.broadcast %58 : vector<1x128xf32> to vector<16x128xf32>
    %60 = arith.addf %55, %59 : vector<16x128xf32>
    %61 = arith.addf %60, %4 : vector<16x128xf32>
    %cst_48 = arith.constant 0.000000e+00 : f32
    %62 = vector.broadcast %cst_48 : f32 to vector<16x128xf32>
    %63 = arith.maximumf %61, %62 : vector<16x128xf32>
    %c0_49 = arith.constant 0 : index
    %c0_50 = arith.constant 0 : index
    %c0_51 = arith.constant 0 : index
    %64 = vector.load %arg8[%c0_49, %c0_50, %c0_51] : memref<1x16x128xf32, #tpu.memory_space<vmem>>, vector<1x16x128xf32>
    %65 = vector.shape_cast %64 : vector<1x16x128xf32> to vector<16x128xf32>
    %66 = vector.shape_cast %63 : vector<16x128xf32> to vector<1x16x128xf32>
    tpu.vector_store %arg8[%c0_49, %c0_50, %c0_51], %66 {strides = array<i32>} : memref<1x16x128xf32, #tpu.memory_space<vmem>>, vector<1x16x128xf32>,
    return
  }
  func.func @transform_0(%arg0: i32) -> (i32, i32, i32) {
    %c0_i32 = arith.constant 0 : i32
    %c0_i32_0 = arith.constant 0 : i32
    %c0_i32_1 = arith.constant 0 : i32
    return %arg0, %c0_i32, %c0_i32_0 : i32, i32, i32
  }
  func.func @transform_1(%arg0: i32) -> (i32, i32, i32) {
    %c0_i32 = arith.constant 0 : i32
    %c0_i32_0 = arith.constant 0 : i32
    %c0_i32_1 = arith.constant 0 : i32
    %c0_i32_2 = arith.constant 0 : i32
    return %c0_i32, %c0_i32_0, %c0_i32_1 : i32, i32, i32
  }
  func.func @transform_2(%arg0: i32) -> (i32, i32) {
    %c0_i32 = arith.constant 0 : i32
    %c0_i32_0 = arith.constant 0 : i32
    %c0_i32_1 = arith.constant 0 : i32
    return %c0_i32, %c0_i32_0 : i32, i32
  }
  func.func @transform_3(%arg0: i32) -> (i32, i32) {
    %c0_i32 = arith.constant 0 : i32
    %c0_i32_0 = arith.constant 0 : i32
    %c0_i32_1 = arith.constant 0 : i32
    return %c0_i32, %c0_i32_0 : i32, i32
  }
  func.func @transform_4(%arg0: i32) -> (i32, i32, i32) {
    %c0_i32 = arith.constant 0 : i32
    %c0_i32_0 = arith.constant 0 : i32
    %c0_i32_1 = arith.constant 0 : i32
    %c0_i32_2 = arith.constant 0 : i32
    return %c0_i32, %c0_i32_0, %c0_i32_1 : i32, i32, i32
  }
  func.func @transform_5(%arg0: i32) -> (i32, i32) {
    %c0_i32 = arith.constant 0 : i32
    %c0_i32_0 = arith.constant 0 : i32
    %c0_i32_1 = arith.constant 0 : i32
    return %c0_i32, %c0_i32_0 : i32, i32
  }
  func.func @transform_6(%arg0: i32) -> (i32, i32) {
    %c0_i32 = arith.constant 0 : i32
    %c0_i32_0 = arith.constant 0 : i32
    %c0_i32_1 = arith.constant 0 : i32
    return %c0_i32, %c0_i32_0 : i32, i32
  }
  func.func @transform_7(%arg0: i32) -> (i32, i32, i32) {
    %c0_i32 = arith.constant 0 : i32
    %c0_i32_0 = arith.constant 0 : i32
    %c0_i32_1 = arith.constant 0 : i32
    return %arg0, %c0_i32, %c0_i32_0 : i32, i32, i32
  }
}

</mosaic_0001>

<llo_original>
// kernel: basic_block.1
$region0: #{basic_block.1}
  #allocation0 [shape = 'u32[]', space=smem, size = 0x4, offset = 0x4, fixed_abs, tag = 'smem constant byte address 0x4 - core index']
  #allocation1 [shape = 'u32[144,128]{1,0:T(1,128)}', space=vmem, size = 0x12000, scoped, tag = 'internal scratch']
  #allocation2 [shape = 'f32[18,128]{1,0:T(8,128)}', space=vmem, size = 0x3000, scoped, tag = 'scratch operand']
  %s0 = inlined_call_operand.vmem [shape: f32[4,16,128], index: 0, kind: input, shape index: {}]
  %s1 = inlined_call_operand.vmem [shape: bf16[3,128,128], index: 1, kind: input, shape index: {}]
  %s2 = inlined_call_operand.vmem [shape: f32[1,128], index: 2, kind: input, shape index: {}]
  %s3 = inlined_call_operand.vmem [shape: f32[1,128], index: 3, kind: input, shape index: {}]
  %s4 = inlined_call_operand.vmem [shape: bf16[3,128,128], index: 4, kind: input, shape index: {}]
  %s5 = inlined_call_operand.vmem [shape: f32[1,128], index: 5, kind: input, shape index: {}]
  %s6 = inlined_call_operand.vmem [shape: f32[1,128], index: 6, kind: input, shape index: {}]
  %s7 = inlined_call_operand.vmem [shape: f32[4,16,128], index: 7, kind: output, shape index: {}]
  %s8 = sld [smem:[#allocation0]]
  $region61: #{basic_block.1} parent=0
    _
  %s10 = ssub.s32 1, %s8
  %s11 = scalar_select 0, %s10, %s8
  loop: start=0, step=1, limit=6
  $region2: #{basic_block.1} parent=0 // loop_pre_header
    _
  $region3: #{basic_block.1} parent=0 // loop_header
    %s13 = sphi 0, %s17
    %p14 = scmp.ge.s32.totalorder %s13, 6
    %s23 = sphi 0, %s25
    %s26 = sphi 0, %s23
    %s27 = sphi 0, %s26
    %s43 = sphi 0, %s27
    %s47 = sphi 0, %s47
    %s49 = sphi 0, %s47
    %s50 = sphi 0, %s49
    %s64 = sphi 0, %s50
    %s68 = sphi 0, %s68
    %s70 = sphi 0, %s68
    %s71 = sphi 0, %s70
    %s85 = sphi 0, %s71
    %s89 = sphi 0, %s89
    %s91 = sphi 0, %s89
    %s92 = sphi 0, %s91
    %s106 = sphi 0, %s92
    %s110 = sphi 0, %s110
    %s112 = sphi 0, %s110
    %s113 = sphi 0, %s112
    %s127 = sphi 0, %s113
    %s131 = sphi 0, %s131
    %s133 = sphi 0, %s131
    %s134 = sphi 0, %s133
    %s148 = sphi 0, %s134
    %s152 = sphi 0, %s152
    %s154 = sphi 0, %s152
    %s155 = sphi 0, %s154
    %s169 = sphi 0, %s155
    %s175 = sphi 0, %s177
    %s178 = sphi 0, %s175
    %s179 = sphi 0, %s178
    %s195 = sphi 0, %s179
  $region4: #{basic_block.1} parent=0 // loop_header_branch
    %16 = sbr.rel (%p14) target = $region8
  $region5: #{basic_block.1} parent=0 // loop_body
    %s18 = ssub.s32 %s13, 1
    %s19 = ssub.s32 %s13, 2
    %s20 = sadd.s32 %s13, 1
    %s21 = ssub.s32 %s13, %s20
    %p22 = scmp.eq.s32.totalorder %s21, 0
    %s24 = sadd.s32 %s23, 1
    %s25 = scalar_select %p22, %s23, %s24
    %p28 = pneg %p22
    %p29 = scmp.eq.s32.totalorder %s13, 3
    %p30 = por %p28, %p29
    %p31 = scmp.ne.s32.totalorder %s23, %s26
    %p32 = scmp.eq.s32.totalorder %s13, 0
    %p33 = por %p31, %p32
    %p34 = scmp.ne.s32.totalorder %s23, %s26
    %p35 = scmp.eq.s32.totalorder %s18, 3
    %p36 = por %p34, %p35
    %p37 = scmp.ne.s32.totalorder %s26, %s27
    %p38 = scmp.eq.s32.totalorder %s18, 0
    %p39 = por %p37, %p38
    %p40 = scmp.ne.s32.totalorder %s26, %s27
    %p41 = scmp.eq.s32.totalorder %s19, 3
    %p42 = por %p40, %p41
    %p44 = scmp.ne.s32.totalorder %s27, %s43
    %p45 = scmp.eq.s32.totalorder %s19, 0
    %p46 = por %p44, %p45
    %s48 = sadd.s32 %s47, 1
    %p51 = scmp.eq.s32.totalorder %s13, 3
    %p52 = scmp.ne.s32.totalorder %s47, %s49
    %p53 = scmp.eq.s32.totalorder %s13, 0
    %p54 = por %p52, %p53
    %p55 = scmp.ne.s32.totalorder %s47, %s49
    %p56 = scmp.eq.s32.totalorder %s18, 3
    %p57 = por %p55, %p56
    %p58 = scmp.ne.s32.totalorder %s49, %s50
    %p59 = scmp.eq.s32.totalorder %s18, 0
    %p60 = por %p58, %p59
    %p61 = scmp.ne.s32.totalorder %s49, %s50
    %p62 = scmp.eq.s32.totalorder %s19, 3
    %p63 = por %p61, %p62
    %p65 = scmp.ne.s32.totalorder %s50, %s64
    %p66 = scmp.eq.s32.totalorder %s19, 0
    %p67 = por %p65, %p66
    %s69 = sadd.s32 %s68, 1
    %p72 = scmp.eq.s32.totalorder %s13, 3
    %p73 = scmp.ne.s32.totalorder %s68, %s70
    %p74 = scmp.eq.s32.totalorder %s13, 0
    %p75 = por %p73, %p74
    %p76 = scmp.ne.s32.totalorder %s68, %s70
    %p77 = scmp.eq.s32.totalorder %s18, 3
    %p78 = por %p76, %p77
    %p79 = scmp.ne.s32.totalorder %s70, %s71
    %p80 = scmp.eq.s32.totalorder %s18, 0
    %p81 = por %p79, %p80
    %p82 = scmp.ne.s32.totalorder %s70, %s71
    %p83 = scmp.eq.s32.totalorder %s19, 3
    %p84 = por %p82, %p83
    %p86 = scmp.ne.s32.totalorder %s71, %s85
    %p87 = scmp.eq.s32.totalorder %s19, 0
    %p88 = por %p86, %p87
    %s90 = sadd.s32 %s89, 1
    %p93 = scmp.eq.s32.totalorder %s13, 3
    %p94 = scmp.ne.s32.totalorder %s89, %s91
    %p95 = scmp.eq.s32.totalorder %s13, 0
    %p96 = por %p94, %p95
    %p97 = scmp.ne.s32.totalorder %s89, %s91
    %p98 = scmp.eq.s32.totalorder %s18, 3
    %p99 = por %p97, %p98
    %p100 = scmp.ne.s32.totalorder %s91, %s92
    %p101 = scmp.eq.s32.totalorder %s18, 0
    %p102 = por %p100, %p101
    %p103 = scmp.ne.s32.totalorder %s91, %s92
    %p104 = scmp.eq.s32.totalorder %s19, 3
    %p105 = por %p103, %p104
    %p107 = scmp.ne.s32.totalorder %s92, %s106
    %p108 = scmp.eq.s32.totalorder %s19, 0
    %p109 = por %p107, %p108
    %s111 = sadd.s32 %s110, 1
    %p114 = scmp.eq.s32.totalorder %s13, 3
    %p115 = scmp.ne.s32.totalorder %s110, %s112
    %p116 = scmp.eq.s32.totalorder %s13, 0
    %p117 = por %p115, %p116
    %p118 = scmp.ne.s32.totalorder %s110, %s112
    %p119 = scmp.eq.s32.totalorder %s18, 3
    %p120 = por %p118, %p119
    %p121 = scmp.ne.s32.totalorder %s112, %s113
    %p122 = scmp.eq.s32.totalorder %s18, 0
    %p123 = por %p121, %p122
    %p124 = scmp.ne.s32.totalorder %s112, %s113
    %p125 = scmp.eq.s32.totalorder %s19, 3
    %p126 = por %p124, %p125
    %p128 = scmp.ne.s32.totalorder %s113, %s127
    %p129 = scmp.eq.s32.totalorder %s19, 0
    %p130 = por %p128, %p129
    %s132 = sadd.s32 %s131, 1
    %p135 = scmp.eq.s32.totalorder %s13, 3
    %p136 = scmp.ne.s32.totalorder %s131, %s133
    %p137 = scmp.eq.s32.totalorder %s13, 0
    %p138 = por %p136, %p137
    %p139 = scmp.ne.s32.totalorder %s131, %s133
    %p140 = scmp.eq.s32.totalorder %s18, 3
    %p141 = por %p139, %p140
    %p142 = scmp.ne.s32.totalorder %s133, %s134
    %p143 = scmp.eq.s32.totalorder %s18, 0
    %p144 = por %p142, %p143
    %p145 = scmp.ne.s32.totalorder %s133, %s134
    %p146 = scmp.eq.s32.totalorder %s19, 3
    %p147 = por %p145, %p146
    %p149 = scmp.ne.s32.totalorder %s134, %s148
    %p150 = scmp.eq.s32.totalorder %s19, 0
    %p151 = por %p149, %p150
    %s153 = sadd.s32 %s152, 1
    %p156 = scmp.eq.s32.totalorder %s13, 3
    %p157 = scmp.ne.s32.totalorder %s152, %s154
    %p158 = scmp.eq.s32.totalorder %s13, 0
    %p159 = por %p157, %p158
    %p160 = scmp.ne.s32.totalorder %s152, %s154
    %p161 = scmp.eq.s32.totalorder %s18, 3
    %p162 = por %p160, %p161
    %p163 = scmp.ne.s32.totalorder %s154, %s155
    %p164 = scmp.eq.s32.totalorder %s18, 0
    %p165 = por %p163, %p164
    %p166 = scmp.ne.s32.totalorder %s154, %s155
    %p167 = scmp.eq.s32.totalorder %s19, 3
    %p168 = por %p166, %p167
    %p170 = scmp.ne.s32.totalorder %s155, %s169
    %p171 = scmp.eq.s32.totalorder %s19, 0
    %p172 = por %p170, %p171
    %s173 = ssub.s32 %s13, %s20
    %p174 = scmp.eq.s32.totalorder %s173, 0
    %s176 = sadd.s32 %s175, 1
    %s177 = scalar_select %p174, %s175, %s176
    %p180 = pneg %p174
    %p181 = scmp.eq.s32.totalorder %s13, 3
    %p182 = por %p180, %p181
    %p183 = scmp.ne.s32.totalorder %s175, %s178
    %p184 = scmp.eq.s32.totalorder %s13, 0
    %p185 = por %p183, %p184
    %p186 = scmp.ne.s32.totalorder %s175, %s178
    %p187 = scmp.eq.s32.totalorder %s18, 3
    %p188 = por %p186, %p187
    %p189 = scmp.ne.s32.totalorder %s178, %s179
    %p190 = scmp.eq.s32.totalorder %s18, 0
    %p191 = por %p189, %p190
    %p192 = scmp.ne.s32.totalorder %s178, %s179
    %p193 = scmp.eq.s32.totalorder %s19, 3
    %p194 = por %p192, %p193
    %p196 = scmp.ne.s32.totalorder %s179, %s195
    %p197 = scmp.eq.s32.totalorder %s19, 0
    %p198 = por %p196, %p197
    %p199 = scmp.le.s32.totalorder 1, %s13
    %p200 = scmp.lt.s32.totalorder %s13, 5
    %p201 = pnand %p199, %p200
    %p202 = pneg %p201
    // Predicated region
    $region9: #{basic_block.1} parent=5 // pred_check
      _
    $region10: #{basic_block.1} parent=5 // pred_check_branch
      %204 = sbr.rel (%p201) target = $region12
    $region11: #{basic_block.1} parent=5 // pred_region
      %s205 = ssub.s32 %s13, 1
      // Predicated region
      $region13: #{basic_block.1} parent=11 // pred_check
        %p206 = pneg %p60
      $region14: #{basic_block.1} parent=11 // pred_check_branch
        %208 = sbr.rel (%p206) target = $region16
      $region15: #{basic_block.1} parent=11 // pred_region
        _
      $region16: #{basic_block.1} parent=11 // pred_fallthru
        _
      // Predicated region
      $region17: #{basic_block.1} parent=11 // pred_check
        %p209 = pneg %p81
      $region18: #{basic_block.1} parent=11 // pred_check_branch
        %211 = sbr.rel (%p209) target = $region20
      $region19: #{basic_block.1} parent=11 // pred_region
        _
      $region20: #{basic_block.1} parent=11 // pred_fallthru
        _
      // Predicated region
      $region21: #{basic_block.1} parent=11 // pred_check
        %p212 = pneg %p102
      $region22: #{basic_block.1} parent=11 // pred_check_branch
        %214 = sbr.rel (%p212) target = $region24
      $region23: #{basic_block.1} parent=11 // pred_region
        _
      $region24: #{basic_block.1} parent=11 // pred_fallthru
        _
      // Predicated region
      $region25: #{basic_block.1} parent=11 // pred_check
        %p215 = pneg %p123
      $region26: #{basic_block.1} parent=11 // pred_check_branch
        %217 = sbr.rel (%p215) target = $region28
      $region27: #{basic_block.1} parent=11 // pred_region
        _
      $region28: #{basic_block.1} parent=11 // pred_fallthru
        _
      // Predicated region
      $region29: #{basic_block.1} parent=11 // pred_check
        %p218 = pneg %p144
      $region30: #{basic_block.1} parent=11 // pred_check_branch
        %220 = sbr.rel (%p218) target = $region32
      $region31: #{basic_block.1} parent=11 // pred_region
        _
      $region32: #{basic_block.1} parent=11 // pred_fallthru
        _
      // Predicated region
      $region33: #{basic_block.1} parent=11 // pred_check
        %p221 = pneg %p165
      $region34: #{basic_block.1} parent=11 // pred_check_branch
        %223 = sbr.rel (%p221) target = $region36
      $region35: #{basic_block.1} parent=11 // pred_region
        _
      $region36: #{basic_block.1} parent=11 // pred_fallthru
        _
    $region12: #{basic_block.1} parent=5 // pred_fallthru
      _
    %p224 = scmp.lt.s32.totalorder %s13, 4
    // Predicated region
    $region37: #{basic_block.1} parent=5 // pred_check
      %p225 = pneg %p224
    $region38: #{basic_block.1} parent=5 // pred_check_branch
      %227 = sbr.rel (%p225) target = $region40
    $region39: #{basic_block.1} parent=5 // pred_region
      // Predicated region
      $region41: #{basic_block.1} parent=39 // pred_check
        %p228 = pneg %p33
      $region42: #{basic_block.1} parent=39 // pred_check_branch
        %230 = sbr.rel (%p228) target = $region44
      $region43: #{basic_block.1} parent=39 // pred_region
        %p231 = scmp.lt.s32.totalorder %s13, 3
        %s232 = scalar_select %p231, %s13, 3
        %s233 = smul.addr %s232, 2
        %s234 = smul.addr %s233, 8
        %s235 = scalar_lea.vmem %s0, %s234
      $region44: #{basic_block.1} parent=39 // pred_fallthru
        _
    $region40: #{basic_block.1} parent=5 // pred_fallthru
      _
    %p236 = scmp.le.s32.totalorder 1, %s13
    %p237 = scmp.lt.s32.totalorder %s13, 5
    %p238 = pnand %p236, %p237
    %p239 = pneg %p238
    // Predicated region
    $region45: #{basic_block.1} parent=5 // pred_check
      _
    $region46: #{basic_block.1} parent=5 // pred_check_branch
      %241 = sbr.rel (%p238) target = $region48
    $region47: #{basic_block.1} parent=5 // pred_region
      %s242 = ssub.s32 %s13, 1
      %p243 = scmp.lt.s32.totalorder %s18, 3
      %s244 = scalar_select %p243, %s18, 3
      %s245 = smul.addr %s244, 2
      %s246 = smul.addr %s245, 8
      %s247 = scalar_lea.vmem %s0, %s246
      %p248 = pneg %p39
      %p249 = pneg %p36
      %p250 = pneg %p60
      %p251 = pneg %p57
      %p252 = pneg %p81
      %p253 = pneg %p78
      %p254 = pneg %p102
      %p255 = pneg %p99
      %p256 = pneg %p123
      %p257 = pneg %p120
      %p258 = pneg %p144
      %p259 = pneg %p141
      %p260 = pneg %p165
      %p261 = pneg %p162
      %p262 = pneg %p191
      %p263 = pneg %p188
      %p264 = scmp.lt.s32.totalorder %s18, 3
      %s265 = scalar_select %p264, %s18, 3
      %s266 = smul.addr %s265, 2
      %s267 = smul.addr %s266, 8
      %s268 = scalar_lea.vmem %s7, %s267
      %p269 = scmp.lt.s32.totalorder %s18, 3
      %s270 = scalar_select %p269, %s18, 3
      %s271 = smul.addr %s270, 2
      %s272 = smul.addr %s271, 8
      %s273 = scalar_lea.vmem %s0, %s272
      %p274 = scmp.lt.s32.totalorder %s18, 3
      %s275 = scalar_select %p274, %s18, 3
      %s276 = smul.addr %s275, 2
      %s277 = smul.addr %s276, 8
      %s278 = scalar_lea.vmem %s7, %s277
      %280 = vst [vmem:[#allocation2] sm:$0x1] 0.0
      %281 = vst [vmem:[#allocation2 + $0x11] sm:$0x1] 0.0
      %v282 = vld [vmem:[%s273] sm:$0xff]
      %v283 = vld [vmem:[%s273 + $0x8] sm:$0xff]
      %284 = vst [vmem:[#allocation2 + $0x1] sm:$0xff] %v282
      %285 = vst [vmem:[#allocation2 + $0x9] sm:$0xff] %v283
      %v286 = vld [vmem:[#allocation2] sm:$0xff]
      %v287 = vld [vmem:[#allocation2 + $0x8] sm:$0xff]
      %v288 = vpack.c.bf16 %v287, %v286
      %v289 = vld [vmem:[%s1] sm:$0xf]
      %v290 = vld [vmem:[%s1 + $0x4] sm:$0xf]
      %v291 = vld [vmem:[%s1 + $0x8] sm:$0xf]
      %v292 = vld [vmem:[%s1 + $0xc] sm:$0xf]
      %v293 = vld [vmem:[%s1 + $0x10] sm:$0xf]
      %v294 = vld [vmem:[%s1 + $0x14] sm:$0xf]
      %v295 = vld [vmem:[%s1 + $0x18] sm:$0xf]
      %v296 = vld [vmem:[%s1 + $0x1c] sm:$0xf]
      %v297 = vld [vmem:[%s1 + $0x20] sm:$0xf]
      %v298 = vld [vmem:[%s1 + $0x24] sm:$0xf]
      %v299 = vld [vmem:[%s1 + $0x28] sm:$0xf]
      %v300 = vld [vmem:[%s1 + $0x2c] sm:$0xf]
      %v301 = vld [vmem:[%s1 + $0x30] sm:$0xf]
      %v302 = vld [vmem:[%s1 + $0x34] sm:$0xf]
      %v303 = vld [vmem:[%s1 + $0x38] sm:$0xf]
      %v304 = vld [vmem:[%s1 + $0x3c] sm:$0xf]
      %v305 = vpack.c.bf16 %v283, %v282
      %s306 = scalar_lea.vmem %s1, 64
      %v307 = vld [vmem:[%s306] sm:$0xf]
      %v308 = vld [vmem:[%s306 + $0x4] sm:$0xf]
      %v309 = vld [vmem:[%s306 + $0x8] sm:$0xf]
      %v310 = vld [vmem:[%s306 + $0xc] sm:$0xf]
      %v311 = vld [vmem:[%s306 + $0x10] sm:$0xf]
      %v312 = vld [vmem:[%s306 + $0x14] sm:$0xf]
      %v313 = vld [vmem:[%s306 + $0x18] sm:$0xf]
      %v314 = vld [vmem:[%s306 + $0x1c] sm:$0xf]
      %v315 = vld [vmem:[%s306 + $0x20] sm:$0xf]
      %v316 = vld [vmem:[%s306 + $0x24] sm:$0xf]
      %v317 = vld [vmem:[%s306 + $0x28] sm:$0xf]
      %v318 = vld [vmem:[%s306 + $0x2c] sm:$0xf]
      %v319 = vld [vmem:[%s306 + $0x30] sm:$0xf]
      %v320 = vld [vmem:[%s306 + $0x34] sm:$0xf]
      %v321 = vld [vmem:[%s306 + $0x38] sm:$0xf]
      %v322 = vld [vmem:[%s306 + $0x3c] sm:$0xf]
      %v339 = vunpack.c.l.b16 %v307
      %v340 = vunpack.c.l.b16 %v308
      %v341 = vunpack.c.l.b16 %v309
      %v342 = vunpack.c.l.b16 %v310
      %v343 = vunpack.c.l.b16 %v311
      %v344 = vunpack.c.l.b16 %v312
      %v345 = vunpack.c.l.b16 %v313
      %v346 = vunpack.c.l.b16 %v314
      %v347 = vunpack.c.l.b16 %v315
      %v348 = vunpack.c.l.b16 %v316
      %v349 = vunpack.c.l.b16 %v317
      %v350 = vunpack.c.l.b16 %v318
      %v351 = vunpack.c.l.b16 %v319
      %v352 = vunpack.c.l.b16 %v320
      %v353 = vunpack.c.l.b16 %v321
      %v354 = vunpack.c.l.b16 %v322
      %v355 = vpack.c.b16 %v340, %v339
      %v356 = vpack.c.b16 %v342, %v341
      %v357 = vpack.c.b16 %v344, %v343
      %v358 = vpack.c.b16 %v346, %v345
      %v359 = vpack.c.b16 %v348, %v347
      %v360 = vpack.c.b16 %v350, %v349
      %v361 = vpack.c.b16 %v352, %v351
      %v362 = vpack.c.b16 %v354, %v353
      %371 = vmatprep.subr.bf16.mxu0 0
      %372 = vmatpush1.bf16.msra.mxu0 %v362
      %373 = vmatprep.subr.bf16.mxu0 0
      %374 = vmatpush1.bf16.msra.mxu0 %v361
      %375 = vmatprep.subr.bf16.mxu0 0
      %376 = vmatpush1.bf16.msra.mxu0 %v360
      %377 = vmatprep.subr.bf16.mxu0 0
      %378 = vmatpush1.bf16.msra.mxu0 %v359
      %379 = vmatprep.subr.bf16.mxu0 0
      %380 = vmatpush1.bf16.msra.mxu0 %v358
      %381 = vmatprep.subr.bf16.mxu0 0
      %382 = vmatpush1.bf16.msra.mxu0 %v357
      %383 = vmatprep.subr.bf16.mxu0 0
      %384 = vmatpush1.bf16.msra.mxu0 %v356
      %385 = vmatprep.subr.bf16.mxu0 0
      %386 = vmatpush1.bf16.msra.mxu0 %v355
      %387 = vmatprep.subr.bf16.mxu0 0
      %388 = vmatpush2.bf16.msra.mxu0 0
      %389 = vmatprep.subr.bf16.mxu0 0
      %390 = vmatpush2.bf16.msra.mxu0 0
      %391 = vmatprep.subr.bf16.mxu0 0
      %392 = vmatpush2.bf16.msra.mxu0 0
      %393 = vmatprep.subr.bf16.mxu0 0
      %394 = vmatpush2.bf16.msra.mxu0 0
      %395 = vmatprep.subr.bf16.mxu0 0
      %396 = vmatpush2.bf16.msra.mxu0 0
      %397 = vmatprep.subr.bf16.mxu0 0
      %398 = vmatpush2.bf16.msra.mxu0 0
      %399 = vmatprep.subr.bf16.mxu0 0
      %400 = vmatpush2.bf16.msra.mxu0 0
      %401 = vmatprep.subr.bf16.mxu0 0
      %402 = vmatpush2.bf16.msra.mxu0 0
      %403 = vmatprep.mubr.bf16.mxu0 0
      %404 = vmatmul.mubr.bf16.gmra.mxu0 %v305
      %v405 = vpop.f32.mrf.mxu0
      %v406 = vadd.f32 0.0, %v405
      %v407 = vpop.f32.mrf.mxu0
      %v408 = vpop.f32.mrf.mxu0
      %v409 = vadd.f32 0.0, %v408
      %v410 = vpop.f32.mrf.mxu0
      %411 = vdwg.mxu0
      %v428 = vunpack.c.l.b16 %v289
      %v429 = vunpack.c.l.b16 %v290
      %v430 = vunpack.c.l.b16 %v291
      %v431 = vunpack.c.l.b16 %v292
      %v432 = vunpack.c.l.b16 %v293
      %v433 = vunpack.c.l.b16 %v294
      %v434 = vunpack.c.l.b16 %v295
      %v435 = vunpack.c.l.b16 %v296
      %v436 = vunpack.c.l.b16 %v297
      %v437 = vunpack.c.l.b16 %v298
      %v438 = vunpack.c.l.b16 %v299
      %v439 = vunpack.c.l.b16 %v300
      %v440 = vunpack.c.l.b16 %v301
      %v441 = vunpack.c.l.b16 %v302
      %v442 = vunpack.c.l.b16 %v303
      %v443 = vunpack.c.l.b16 %v304
      %v444 = vpack.c.b16 %v429, %v428
      %v445 = vpack.c.b16 %v431, %v430
      %v446 = vpack.c.b16 %v433, %v432
      %v447 = vpack.c.b16 %v435, %v434
      %v448 = vpack.c.b16 %v437, %v436
      %v449 = vpack.c.b16 %v439, %v438
      %v450 = vpack.c.b16 %v441, %v440
      %v451 = vpack.c.b16 %v443, %v442
      %460 = vmatprep.subr.bf16.mxu0 0
      %461 = vmatpush1.bf16.msra.mxu0 %v451
      %462 = vmatprep.subr.bf16.mxu0 0
      %463 = vmatpush1.bf16.msra.mxu0 %v450
      %464 = vmatprep.subr.bf16.mxu0 0
      %465 = vmatpush1.bf16.msra.mxu0 %v449
      %466 = vmatprep.subr.bf16.mxu0 0
      %467 = vmatpush1.bf16.msra.mxu0 %v448
      %468 = vmatprep.subr.bf16.mxu0 0
      %469 = vmatpush1.bf16.msra.mxu0 %v447
      %470 = vmatprep.subr.bf16.mxu0 0
      %471 = vmatpush1.bf16.msra.mxu0 %v446
      %472 = vmatprep.subr.bf16.mxu0 0
      %473 = vmatpush1.bf16.msra.mxu0 %v445
      %474 = vmatprep.subr.bf16.mxu0 0
      %475 = vmatpush1.bf16.msra.mxu0 %v444
      %476 = vmatprep.subr.bf16.mxu0 0
      %477 = vmatpush2.bf16.msra.mxu0 0
      %478 = vmatprep.subr.bf16.mxu0 0
      %479 = vmatpush2.bf16.msra.mxu0 0
      %480 = vmatprep.subr.bf16.mxu0 0
      %481 = vmatpush2.bf16.msra.mxu0 0
      %482 = vmatprep.subr.bf16.mxu0 0
      %483 = vmatpush2.bf16.msra.mxu0 0
      %484 = vmatprep.subr.bf16.mxu0 0
      %485 = vmatpush2.bf16.msra.mxu0 0
      %486 = vmatprep.subr.bf16.mxu0 0
      %487 = vmatpush2.bf16.msra.mxu0 0
      %488 = vmatprep.subr.bf16.mxu0 0
      %489 = vmatpush2.bf16.msra.mxu0 0
      %490 = vmatprep.subr.bf16.mxu0 0
      %491 = vmatpush2.bf16.msra.mxu0 0
      %492 = vmatprep.mubr.bf16.mxu0 0
      %493 = vmatmul.mubr.bf16.gmra.mxu0 %v288
      %v494 = vpop.f32.mrf.mxu0
      %v495 = vadd.f32 %v406, %v494
      %v496 = vpop.f32.mrf.mxu0
      %v497 = vpop.f32.mrf.mxu0
      %v498 = vadd.f32 %v409, %v497
      %v499 = vpop.f32.mrf.mxu0
      %500 = vdwg.mxu0
      %v501 = vld [vmem:[#allocation2 + $0x2] sm:$0xff]
      %v502 = vld [vmem:[#allocation2 + $0xa] sm:$0xff]
      %v503 = vpack.c.bf16 %v502, %v501
      %s504 = scalar_lea.vmem %s1, 128
      %v505 = vld [vmem:[%s504] sm:$0xf]
      %v506 = vld [vmem:[%s504 + $0x4] sm:$0xf]
      %v507 = vld [vmem:[%s504 + $0x8] sm:$0xf]
      %v508 = vld [vmem:[%s504 + $0xc] sm:$0xf]
      %v509 = vld [vmem:[%s504 + $0x10] sm:$0xf]
      %v510 = vld [vmem:[%s504 + $0x14] sm:$0xf]
      %v511 = vld [vmem:[%s504 + $0x18] sm:$0xf]
      %v512 = vld [vmem:[%s504 + $0x1c] sm:$0xf]
      %v513 = vld [vmem:[%s504 + $0x20] sm:$0xf]
      %v514 = vld [vmem:[%s504 + $0x24] sm:$0xf]
      %v515 = vld [vmem:[%s504 + $0x28] sm:$0xf]
      %v516 = vld [vmem:[%s504 + $0x2c] sm:$0xf]
      %v517 = vld [vmem:[%s504 + $0x30] sm:$0xf]
      %v518 = vld [vmem:[%s504 + $0x34] sm:$0xf]
      %v519 = vld [vmem:[%s504 + $0x38] sm:$0xf]
      %v520 = vld [vmem:[%s504 + $0x3c] sm:$0xf]
      %v537 = vunpack.c.l.b16 %v505
      %v538 = vunpack.c.l.b16 %v506
      %v539 = vunpack.c.l.b16 %v507
      %v540 = vunpack.c.l.b16 %v508
      %v541 = vunpack.c.l.b16 %v509
      %v542 = vunpack.c.l.b16 %v510
      %v543 = vunpack.c.l.b16 %v511
      %v544 = vunpack.c.l.b16 %v512
      %v545 = vunpack.c.l.b16 %v513
      %v546 = vunpack.c.l.b16 %v514
      %v547 = vunpack.c.l.b16 %v515
      %v548 = vunpack.c.l.b16 %v516
      %v549 = vunpack.c.l.b16 %v517
      %v550 = vunpack.c.l.b16 %v518
      %v551 = vunpack.c.l.b16 %v519
      %v552 = vunpack.c.l.b16 %v520
      %v553 = vpack.c.b16 %v538, %v537
      %v554 = vpack.c.b16 %v540, %v539
      %v555 = vpack.c.b16 %v542, %v541
      %v556 = vpack.c.b16 %v544, %v543
      %v557 = vpack.c.b16 %v546, %v545
      %v558 = vpack.c.b16 %v548, %v547
      %v559 = vpack.c.b16 %v550, %v549
      %v560 = vpack.c.b16 %v552, %v551
      %569 = vmatprep.subr.bf16.mxu0 0
      %570 = vmatpush1.bf16.msra.mxu0 %v560
      %571 = vmatprep.subr.bf16.mxu0 0
      %572 = vmatpush1.bf16.msra.mxu0 %v559
      %573 = vmatprep.subr.bf16.mxu0 0
      %574 = vmatpush1.bf16.msra.mxu0 %v558
      %575 = vmatprep.subr.bf16.mxu0 0
      %576 = vmatpush1.bf16.msra.mxu0 %v557
      %577 = vmatprep.subr.bf16.mxu0 0
      %578 = vmatpush1.bf16.msra.mxu0 %v556
      %579 = vmatprep.subr.bf16.mxu0 0
      %580 = vmatpush1.bf16.msra.mxu0 %v555
      %581 = vmatprep.subr.bf16.mxu0 0
      %582 = vmatpush1.bf16.msra.mxu0 %v554
      %583 = vmatprep.subr.bf16.mxu0 0
      %584 = vmatpush1.bf16.msra.mxu0 %v553
      %585 = vmatprep.subr.bf16.mxu0 0
      %586 = vmatpush2.bf16.msra.mxu0 0
      %587 = vmatprep.subr.bf16.mxu0 0
      %588 = vmatpush2.bf16.msra.mxu0 0
      %589 = vmatprep.subr.bf16.mxu0 0
      %590 = vmatpush2.bf16.msra.mxu0 0
      %591 = vmatprep.subr.bf16.mxu0 0
      %592 = vmatpush2.bf16.msra.mxu0 0
      %593 = vmatprep.subr.bf16.mxu0 0
      %594 = vmatpush2.bf16.msra.mxu0 0
      %595 = vmatprep.subr.bf16.mxu0 0
      %596 = vmatpush2.bf16.msra.mxu0 0
      %597 = vmatprep.subr.bf16.mxu0 0
      %598 = vmatpush2.bf16.msra.mxu0 0
      %599 = vmatprep.subr.bf16.mxu0 0
      %600 = vmatpush2.bf16.msra.mxu0 0
      %601 = vmatprep.mubr.bf16.mxu0 0
      %602 = vmatmul.mubr.bf16.gmra.mxu0 %v503
      %v603 = vpop.f32.mrf.mxu0
      %v604 = vadd.f32 0.0, %v603
      %v605 = vpop.f32.mrf.mxu0
      %v606 = vpop.f32.mrf.mxu0
      %v607 = vadd.f32 0.0, %v606
      %v608 = vpop.f32.mrf.mxu0
      %609 = vdwg.mxu0
      %v610 = vadd.f32 %v495, %v604
      %v611 = vadd.f32 %v498, %v607
      %v612 = vld [vmem:[%s2] sm:$0x1]
      %v614 = vlaneseq
      %v615 = vshrl.u32 %v614, 7
      %v616 = vsub.s32 0, %v615
      %v617 = vrot.slane %v612, %v616
      %v619 = vmul.f32 %v610, %v617
      %v620 = vmul.f32 %v611, %v617
      %v621 = vld [vmem:[%s3] sm:$0x1]
      %v623 = vlaneseq
      %v624 = vshrl.u32 %v623, 7
      %v625 = vsub.s32 0, %v624
      %v626 = vrot.slane %v621, %v625
      %v628 = vadd.f32 %v619, %v626
      %v629 = vadd.f32 %v620, %v626
      %v630 = vmax.f32 %v628, 0.0
      %v631 = vmax.f32 %v629, 0.0
      %632 = vst [vmem:[#allocation2 + $0x1] sm:$0xff] %v630
      %633 = vst [vmem:[#allocation2 + $0x9] sm:$0xff] %v631
      %v634 = vld [vmem:[#allocation2] sm:$0xff]
      %v635 = vld [vmem:[#allocation2 + $0x8] sm:$0xff]
      %v636 = vpack.c.bf16 %v635, %v634
      %v637 = vld [vmem:[%s4] sm:$0xf]
      %v638 = vld [vmem:[%s4 + $0x4] sm:$0xf]
      %v639 = vld [vmem:[%s4 + $0x8] sm:$0xf]
      %v640 = vld [vmem:[%s4 + $0xc] sm:$0xf]
      %v641 = vld [vmem:[%s4 + $0x10] sm:$0xf]
      %v642 = vld [vmem:[%s4 + $0x14] sm:$0xf]
      %v643 = vld [vmem:[%s4 + $0x18] sm:$0xf]
      %v644 = vld [vmem:[%s4 + $0x1c] sm:$0xf]
      %v645 = vld [vmem:[%s4 + $0x20] sm:$0xf]
      %v646 = vld [vmem:[%s4 + $0x24] sm:$0xf]
      %v647 = vld [vmem:[%s4 + $0x28] sm:$0xf]
      %v648 = vld [vmem:[%s4 + $0x2c] sm:$0xf]
      %v649 = vld [vmem:[%s4 + $0x30] sm:$0xf]
      %v650 = vld [vmem:[%s4 + $0x34] sm:$0xf]
      %v651 = vld [vmem:[%s4 + $0x38] sm:$0xf]
      %v652 = vld [vmem:[%s4 + $0x3c] sm:$0xf]
      %v653 = vpack.c.bf16 %v631, %v630
      %s654 = scalar_lea.vmem %s4, 64
      %v655 = vld [vmem:[%s654] sm:$0xf]
      %v656 = vld [vmem:[%s654 + $0x4] sm:$0xf]
      %v657 = vld [vmem:[%s654 + $0x8] sm:$0xf]
      %v658 = vld [vmem:[%s654 + $0xc] sm:$0xf]
      %v659 = vld [vmem:[%s654 + $0x10] sm:$0xf]
      %v660 = vld [vmem:[%s654 + $0x14] sm:$0xf]
      %v661 = vld [vmem:[%s654 + $0x18] sm:$0xf]
      %v662 = vld [vmem:[%s654 + $0x1c] sm:$0xf]
      %v663 = vld [vmem:[%s654 + $0x20] sm:$0xf]
      %v664 = vld [vmem:[%s654 + $0x24] sm:$0xf]
      %v665 = vld [vmem:[%s654 + $0x28] sm:$0xf]
      %v666 = vld [vmem:[%s654 + $0x2c] sm:$0xf]
      %v667 = vld [vmem:[%s654 + $0x30] sm:$0xf]
      %v668 = vld [vmem:[%s654 + $0x34] sm:$0xf]
      %v669 = vld [vmem:[%s654 + $0x38] sm:$0xf]
      %v670 = vld [vmem:[%s654 + $0x3c] sm:$0xf]
      %v687 = vunpack.c.l.b16 %v655
      %v688 = vunpack.c.l.b16 %v656
      %v689 = vunpack.c.l.b16 %v657
      %v690 = vunpack.c.l.b16 %v658
      %v691 = vunpack.c.l.b16 %v659
      %v692 = vunpack.c.l.b16 %v660
      %v693 = vunpack.c.l.b16 %v661
      %v694 = vunpack.c.l.b16 %v662
      %v695 = vunpack.c.l.b16 %v663
      %v696 = vunpack.c.l.b16 %v664
      %v697 = vunpack.c.l.b16 %v665
      %v698 = vunpack.c.l.b16 %v666
      %v699 = vunpack.c.l.b16 %v667
      %v700 = vunpack.c.l.b16 %v668
      %v701 = vunpack.c.l.b16 %v669
      %v702 = vunpack.c.l.b16 %v670
      %v703 = vpack.c.b16 %v688, %v687
      %v704 = vpack.c.b16 %v690, %v689
      %v705 = vpack.c.b16 %v692, %v691
      %v706 = vpack.c.b16 %v694, %v693
      %v707 = vpack.c.b16 %v696, %v695
      %v708 = vpack.c.b16 %v698, %v697
      %v709 = vpack.c.b16 %v700, %v699
      %v710 = vpack.c.b16 %v702, %v701
      %719 = vmatprep.subr.bf16.mxu0 0
      %720 = vmatpush1.bf16.msra.mxu0 %v710
      %721 = vmatprep.subr.bf16.mxu0 0
      %722 = vmatpush1.bf16.msra.mxu0 %v709
      %723 = vmatprep.subr.bf16.mxu0 0
      %724 = vmatpush1.bf16.msra.mxu0 %v708
      %725 = vmatprep.subr.bf16.mxu0 0
      %726 = vmatpush1.bf16.msra.mxu0 %v707
      %727 = vmatprep.subr.bf16.mxu0 0
      %728 = vmatpush1.bf16.msra.mxu0 %v706
      %729 = vmatprep.subr.bf16.mxu0 0
      %730 = vmatpush1.bf16.msra.mxu0 %v705
      %731 = vmatprep.subr.bf16.mxu0 0
      %732 = vmatpush1.bf16.msra.mxu0 %v704
      %733 = vmatprep.subr.bf16.mxu0 0
      %734 = vmatpush1.bf16.msra.mxu0 %v703
      %735 = vmatprep.subr.bf16.mxu0 0
      %736 = vmatpush2.bf16.msra.mxu0 0
      %737 = vmatprep.subr.bf16.mxu0 0
      %738 = vmatpush2.bf16.msra.mxu0 0
      %739 = vmatprep.subr.bf16.mxu0 0
      %740 = vmatpush2.bf16.msra.mxu0 0
      %741 = vmatprep.subr.bf16.mxu0 0
      %742 = vmatpush2.bf16.msra.mxu0 0
      %743 = vmatprep.subr.bf16.mxu0 0
      %744 = vmatpush2.bf16.msra.mxu0 0
      %745 = vmatprep.subr.bf16.mxu0 0
      %746 = vmatpush2.bf16.msra.mxu0 0
      %747 = vmatprep.subr.bf16.mxu0 0
      %748 = vmatpush2.bf16.msra.mxu0 0
      %749 = vmatprep.subr.bf16.mxu0 0
      %750 = vmatpush2.bf16.msra.mxu0 0
      %751 = vmatprep.mubr.bf16.mxu0 0
      %752 = vmatmul.mubr.bf16.gmra.mxu0 %v653
      %v753 = vpop.f32.mrf.mxu0
      %v754 = vadd.f32 0.0, %v753
      %v755 = vpop.f32.mrf.mxu0
      %v756 = vpop.f32.mrf.mxu0
      %v757 = vadd.f32 0.0, %v756
      %v758 = vpop.f32.mrf.mxu0
      %759 = vdwg.mxu0
      %v776 = vunpack.c.l.b16 %v637
      %v777 = vunpack.c.l.b16 %v638
      %v778 = vunpack.c.l.b16 %v639
      %v779 = vunpack.c.l.b16 %v640
      %v780 = vunpack.c.l.b16 %v641
      %v781 = vunpack.c.l.b16 %v642
      %v782 = vunpack.c.l.b16 %v643
      %v783 = vunpack.c.l.b16 %v644
      %v784 = vunpack.c.l.b16 %v645
      %v785 = vunpack.c.l.b16 %v646
      %v786 = vunpack.c.l.b16 %v647
      %v787 = vunpack.c.l.b16 %v648
      %v788 = vunpack.c.l.b16 %v649
      %v789 = vunpack.c.l.b16 %v650
      %v790 = vunpack.c.l.b16 %v651
      %v791 = vunpack.c.l.b16 %v652
      %v792 = vpack.c.b16 %v777, %v776
      %v793 = vpack.c.b16 %v779, %v778
      %v794 = vpack.c.b16 %v781, %v780
      %v795 = vpack.c.b16 %v783, %v782
      %v796 = vpack.c.b16 %v785, %v784
      %v797 = vpack.c.b16 %v787, %v786
      %v798 = vpack.c.b16 %v789, %v788
      %v799 = vpack.c.b16 %v791, %v790
      %808 = vmatprep.subr.bf16.mxu0 0
      %809 = vmatpush1.bf16.msra.mxu0 %v799
      %810 = vmatprep.subr.bf16.mxu0 0
      %811 = vmatpush1.bf16.msra.mxu0 %v798
      %812 = vmatprep.subr.bf16.mxu0 0
      %813 = vmatpush1.bf16.msra.mxu0 %v797
      %814 = vmatprep.subr.bf16.mxu0 0
      %815 = vmatpush1.bf16.msra.mxu0 %v796
      %816 = vmatprep.subr.bf16.mxu0 0
      %817 = vmatpush1.bf16.msra.mxu0 %v795
      %818 = vmatprep.subr.bf16.mxu0 0
      %819 = vmatpush1.bf16.msra.mxu0 %v794
      %820 = vmatprep.subr.bf16.mxu0 0
      %821 = vmatpush1.bf16.msra.mxu0 %v793
      %822 = vmatprep.subr.bf16.mxu0 0
      %823 = vmatpush1.bf16.msra.mxu0 %v792
      %824 = vmatprep.subr.bf16.mxu0 0
      %825 = vmatpush2.bf16.msra.mxu0 0
      %826 = vmatprep.subr.bf16.mxu0 0
      %827 = vmatpush2.bf16.msra.mxu0 0
      %828 = vmatprep.subr.bf16.mxu0 0
      %829 = vmatpush2.bf16.msra.mxu0 0
      %830 = vmatprep.subr.bf16.mxu0 0
      %831 = vmatpush2.bf16.msra.mxu0 0
      %832 = vmatprep.subr.bf16.mxu0 0
      %833 = vmatpush2.bf16.msra.mxu0 0
      %834 = vmatprep.subr.bf16.mxu0 0
      %835 = vmatpush2.bf16.msra.mxu0 0
      %836 = vmatprep.subr.bf16.mxu0 0
      %837 = vmatpush2.bf16.msra.mxu0 0
      %838 = vmatprep.subr.bf16.mxu0 0
      %839 = vmatpush2.bf16.msra.mxu0 0
      %840 = vmatprep.mubr.bf16.mxu0 0
      %841 = vmatmul.mubr.bf16.gmra.mxu0 %v636
      %v842 = vpop.f32.mrf.mxu0
      %v843 = vadd.f32 %v754, %v842
      %v844 = vpop.f32.mrf.mxu0
      %v845 = vpop.f32.mrf.mxu0
      %v846 = vadd.f32 %v757, %v845
      %v847 = vpop.f32.mrf.mxu0
      %848 = vdwg.mxu0
      %v849 = vld [vmem:[#allocation2 + $0x2] sm:$0xff]
      %v850 = vld [vmem:[#allocation2 + $0xa] sm:$0xff]
      %v851 = vpack.c.bf16 %v850, %v849
      %s852 = scalar_lea.vmem %s4, 128
      %v853 = vld [vmem:[%s852] sm:$0xf]
      %v854 = vld [vmem:[%s852 + $0x4] sm:$0xf]
      %v855 = vld [vmem:[%s852 + $0x8] sm:$0xf]
      %v856 = vld [vmem:[%s852 + $0xc] sm:$0xf]
      %v857 = vld [vmem:[%s852 + $0x10] sm:$0xf]
      %v858 = vld [vmem:[%s852 + $0x14] sm:$0xf]
      %v859 = vld [vmem:[%s852 + $0x18] sm:$0xf]
      %v860 = vld [vmem:[%s852 + $0x1c] sm:$0xf]
      %v861 = vld [vmem:[%s852 + $0x20] sm:$0xf]
      %v862 = vld [vmem:[%s852 + $0x24] sm:$0xf]
      %v863 = vld [vmem:[%s852 + $0x28] sm:$0xf]
      %v864 = vld [vmem:[%s852 + $0x2c] sm:$0xf]
      %v865 = vld [vmem:[%s852 + $0x30] sm:$0xf]
      %v866 = vld [vmem:[%s852 + $0x34] sm:$0xf]
      %v867 = vld [vmem:[%s852 + $0x38] sm:$0xf]
      %v868 = vld [vmem:[%s852 + $0x3c] sm:$0xf]
      %v885 = vunpack.c.l.b16 %v853
      %v886 = vunpack.c.l.b16 %v854
      %v887 = vunpack.c.l.b16 %v855
      %v888 = vunpack.c.l.b16 %v856
      %v889 = vunpack.c.l.b16 %v857
      %v890 = vunpack.c.l.b16 %v858
      %v891 = vunpack.c.l.b16 %v859
      %v892 = vunpack.c.l.b16 %v860
      %v893 = vunpack.c.l.b16 %v861
      %v894 = vunpack.c.l.b16 %v862
      %v895 = vunpack.c.l.b16 %v863
      %v896 = vunpack.c.l.b16 %v864
      %v897 = vunpack.c.l.b16 %v865
      %v898 = vunpack.c.l.b16 %v866
      %v899 = vunpack.c.l.b16 %v867
      %v900 = vunpack.c.l.b16 %v868
      %v901 = vpack.c.b16 %v886, %v885
      %v902 = vpack.c.b16 %v888, %v887
      %v903 = vpack.c.b16 %v890, %v889
      %v904 = vpack.c.b16 %v892, %v891
      %v905 = vpack.c.b16 %v894, %v893
      %v906 = vpack.c.b16 %v896, %v895
      %v907 = vpack.c.b16 %v898, %v897
      %v908 = vpack.c.b16 %v900, %v899
      %917 = vmatprep.subr.bf16.mxu0 0
      %918 = vmatpush1.bf16.msra.mxu0 %v908
      %919 = vmatprep.subr.bf16.mxu0 0
      %920 = vmatpush1.bf16.msra.mxu0 %v907
      %921 = vmatprep.subr.bf16.mxu0 0
      %922 = vmatpush1.bf16.msra.mxu0 %v906
      %923 = vmatprep.subr.bf16.mxu0 0
      %924 = vmatpush1.bf16.msra.mxu0 %v905
      %925 = vmatprep.subr.bf16.mxu0 0
      %926 = vmatpush1.bf16.msra.mxu0 %v904
      %927 = vmatprep.subr.bf16.mxu0 0
      %928 = vmatpush1.bf16.msra.mxu0 %v903
      %929 = vmatprep.subr.bf16.mxu0 0
      %930 = vmatpush1.bf16.msra.mxu0 %v902
      %931 = vmatprep.subr.bf16.mxu0 0
      %932 = vmatpush1.bf16.msra.mxu0 %v901
      %933 = vmatprep.subr.bf16.mxu0 0
      %934 = vmatpush2.bf16.msra.mxu0 0
      %935 = vmatprep.subr.bf16.mxu0 0
      %936 = vmatpush2.bf16.msra.mxu0 0
      %937 = vmatprep.subr.bf16.mxu0 0
      %938 = vmatpush2.bf16.msra.mxu0 0
      %939 = vmatprep.subr.bf16.mxu0 0
      %940 = vmatpush2.bf16.msra.mxu0 0
      %941 = vmatprep.subr.bf16.mxu0 0
      %942 = vmatpush2.bf16.msra.mxu0 0
      %943 = vmatprep.subr.bf16.mxu0 0
      %944 = vmatpush2.bf16.msra.mxu0 0
      %945 = vmatprep.subr.bf16.mxu0 0
      %946 = vmatpush2.bf16.msra.mxu0 0
      %947 = vmatprep.subr.bf16.mxu0 0
      %948 = vmatpush2.bf16.msra.mxu0 0
      %949 = vmatprep.mubr.bf16.mxu0 0
      %950 = vmatmul.mubr.bf16.gmra.mxu0 %v851
      %v951 = vpop.f32.mrf.mxu0
      %v952 = vadd.f32 0.0, %v951
      %v953 = vpop.f32.mrf.mxu0
      %v954 = vpop.f32.mrf.mxu0
      %v955 = vadd.f32 0.0, %v954
      %v956 = vpop.f32.mrf.mxu0
      %957 = vdwg.mxu0
      %v958 = vadd.f32 %v843, %v952
      %v959 = vadd.f32 %v846, %v955
      %v960 = vld [vmem:[%s5] sm:$0x1]
      %v962 = vlaneseq
      %v963 = vshrl.u32 %v962, 7
      %v964 = vsub.s32 0, %v963
      %v965 = vrot.slane %v960, %v964
      %v967 = vmul.f32 %v958, %v965
      %v968 = vmul.f32 %v959, %v965
      %v969 = vld [vmem:[%s6] sm:$0x1]
      %v971 = vlaneseq
      %v972 = vshrl.u32 %v971, 7
      %v973 = vsub.s32 0, %v972
      %v974 = vrot.slane %v969, %v973
      %v976 = vadd.f32 %v967, %v974
      %v977 = vadd.f32 %v968, %v974
      %v978 = vadd.f32 %v976, %v282
      %v979 = vadd.f32 %v977, %v283
      %v980 = vmax.f32 %v978, 0.0
      %v981 = vmax.f32 %v979, 0.0
      %982 = vst [vmem:[%s278] sm:$0xff] %v980
      %983 = vst [vmem:[%s278 + $0x8] sm:$0xff] %v981
      %p984 = scmp.lt.s32.totalorder %s18, 3
      %s985 = scalar_select %p984, %s18, 3
      %s986 = smul.addr %s985, 2
      %s987 = smul.addr %s986, 8
      %s988 = scalar_lea.vmem %s7, %s987
      // Predicated region
      $region49: #{basic_block.1} parent=47 // pred_check
        %p989 = pneg %p188
      $region50: #{basic_block.1} parent=47 // pred_check_branch
        %991 = sbr.rel (%p989) target = $region52
      $region51: #{basic_block.1} parent=47 // pred_region
        _
      $region52: #{basic_block.1} parent=47 // pred_fallthru
        _
    $region48: #{basic_block.1} parent=5 // pred_fallthru
      _
    %p992 = scmp.le.s32.totalorder 2, %s13
    // Predicated region
    $region53: #{basic_block.1} parent=5 // pred_check
      %p993 = pneg %p992
    $region54: #{basic_block.1} parent=5 // pred_check_branch
      %995 = sbr.rel (%p993) target = $region56
    $region55: #{basic_block.1} parent=5 // pred_region
      %s996 = ssub.s32 %s13, 2
      // Predicated region
      $region57: #{basic_block.1} parent=55 // pred_check
        %p997 = pneg %p194
      $region58: #{basic_block.1} parent=55 // pred_check_branch
        %999 = sbr.rel (%p997) target = $region60
      $region59: #{basic_block.1} parent=55 // pred_region
        %p1000 = scmp.lt.s32.totalorder %s19, 3
        %s1001 = scalar_select %p1000, %s19, 3
        %s1002 = smul.addr %s1001, 2
        %s1003 = smul.addr %s1002, 8
        %s1004 = scalar_lea.vmem %s7, %s1003
      $region60: #{basic_block.1} parent=55 // pred_fallthru
        _
    $region56: #{basic_block.1} parent=5 // pred_fallthru
      _
  $region6: #{basic_block.1} parent=0 // loop_footer
    %s17 = sadd.s32 1, %s13
  $region7: #{basic_block.1} parent=0 // loop_footer_branch
    %12 = sbr.rel target = $region3
  $region8: #{basic_block.1} parent=0 // loop_exit
    _

</llo_original>
